<compile_context>
chip_gen: v7x
topology: tpu7x:2x2x1
jax: 0.10.0
libtpu: 0.0.40
codegen_flags: <defaults>
</compile_context>

<pallas_src>
import jax
import jax.numpy as jnp
from jax.experimental import pallas as pl
from jax.experimental.pallas import tpu as pltpu


def _round_up(x, m):
    return ((x + m - 1) // m) * m


# ---------------------------------------------------------------------------
# Kernel: one (tm, tn) output tile, accumulating over the K grid axis (axis 2)
# ---------------------------------------------------------------------------
def _linear_lrelu_kernel(x_ref, w_ref, b_ref, o_ref, acc_ref):
    k = pl.program_id(2)

    @pl.when(k == 0)
    def _():
        acc_ref[...] = jnp.zeros_like(acc_ref)

    # x_ref: (tm, tk) activations, cast to bf16 in-register.
    # w_ref: (tk, tn) pre-transposed bf16 weight tile.
    # Standard contraction -> bf16 MXU matmul with f32 accumulation.
    acc_ref[...] += jnp.dot(
        x_ref[...].astype(jnp.bfloat16),
        w_ref[...],
        preferred_element_type=jnp.float32,
    )

    # Epilogue (bias + LeakyReLU + cast) only on the final K step, keeping the
    # inner K loop pure MXU accumulate.
    @pl.when(k == pl.num_programs(2) - 1)
    def _():
        y = acc_ref[...] + b_ref[...]
        y = jnp.maximum(y, 0.2 * y)          # LeakyReLU(0.2); slope < 1
        o_ref[...] = y.astype(o_ref.dtype)


# ---------------------------------------------------------------------------
# Tile selection / VMEM budgeting
# ---------------------------------------------------------------------------
def _choose_tiles(m, n, k):
    """Pick (tm, tn, tk): sublane-aligned M, lane-dense (128-mult) N/K tiles,
    sized so the double-buffered footprint fits every generation (v7x 64 MiB
    physical VMEM is the tightest)."""
    m_al = _round_up(max(m, 1), 8)
    n_al = _round_up(max(n, 1), 128)
    k_al = _round_up(max(k, 1), 128)

    if m_al <= 512:
        # Small-M (inference) fast path: single M block; widen N/K tiles so
        # the weight streams from HBM exactly once per N block.
        tm = m_al
        tn = min(1024, n_al)
        tk = min(2048, k_al)
        # TODO(synk): if an xprof trace shows exposed weight-DMA waits here,
        # add pipeline_mode=pl.Buffered(3) on the weight BlockSpec.
    else:
        # Large-M baseline: 512x512 output tiles, tk=1024 (~9 MiB resident).
        tm = min(512, m_al)
        tn = min(512, n_al)
        tk = min(1024, k_al)

    # v7x megacore: make sure the parallel (M, N) grid has >= 2 blocks when the
    # problem is big enough to split (harmless no-op on single-TC v5e/v6e).
    m_blocks = -(-m_al // tm)
    n_blocks = -(-n_al // tn)
    if m_blocks * n_blocks < 2 and n_al >= 256 and tn > 128:
        tn = max(128, _round_up(n_al // 2, 128))

    return tm, tn, tk


def _vmem_bytes(tm, tn, tk, x_itemsize, w_itemsize, out_itemsize):
    return (
        2 * tm * tk * x_itemsize        # double-buffered x tiles
        + 2 * tk * tn * w_itemsize      # double-buffered weight tiles
        + 2 * tn * 4                    # double-buffered bias tiles
        + 2 * tm * tn * out_itemsize    # double-buffered output tiles
        + tm * tn * 4                   # f32 accumulator scratch
    )


# ---------------------------------------------------------------------------
# Parameter prep (run once, off the hot path) + hot-path apply
# ---------------------------------------------------------------------------
def prepare_linear_params(weight, bias, m_hint):
    """One-time prep of the static nn.Linear parameters.

    weight: (N, K) in PyTorch layout (out_features, in_features)
    bias:   (N,)
    Returns (w_kn_bf16, bias_f32_2d, tiles) consumed by linear_lrelu_apply.
    """
    n, k = weight.shape
    assert bias.shape == (n,)
    tm, tn, tk = _choose_tiles(m_hint, n, k)
    np_, kp = _round_up(n, tn), _round_up(k, tk)
    # Pre-transpose to (K, N), zero-pad to tile multiples, cast to bf16 once.
    w_kn = jnp.pad(weight.T, ((0, kp - k), (0, np_ - n))).astype(jnp.bfloat16)
    b2d = jnp.pad(bias.astype(jnp.float32), (0, np_ - n)).reshape(1, np_)
    return w_kn, b2d, (tm, tn, tk, n, k)


def linear_lrelu_apply(x, w_kn, b2d, tiles):
    """Hot path: out = LeakyReLU_{0.2}(x @ W^T + b) with prepared params."""
    tm, tn, tk, n, k = tiles
    m, kx = x.shape
    assert kx == k
    kp, np_ = w_kn.shape
    mp = _round_up(m, tm)

    # Pad activations only when not tile-aligned (zero K-padding adds 0 to the
    # accumulation; padded M rows are sliced off at the end).
    if (mp, kp) != (m, k):
        x = jnp.pad(x, ((0, mp - m), (0, kp - k)))

    grid = (mp // tm, np_ // tn, kp // tk)
    out_dtype = x.dtype
    vmem_needed = _vmem_bytes(
        tm, tn, tk,
        jnp.dtype(x.dtype).itemsize,
        jnp.dtype(w_kn.dtype).itemsize,
        jnp.dtype(out_dtype).itemsize,
    )

    out_padded = pl.pallas_call(
        _linear_lrelu_kernel,
        out_shape=jax.ShapeDtypeStruct((mp, np_), out_dtype),
        grid_spec=pltpu.PrefetchScalarGridSpec(
            num_scalar_prefetch=0,
            grid=grid,
            in_specs=[
                pl.BlockSpec((tm, tk), lambda i, j, kk: (i, kk)),   # x tile
                pl.BlockSpec((tk, tn), lambda i, j, kk: (kk, j)),   # W^T tile (K, N)
                pl.BlockSpec((1, tn), lambda i, j, kk: (0, j)),     # bias tile
            ],
            out_specs=pl.BlockSpec((tm, tn), lambda i, j, kk: (i, j)),
            scratch_shapes=[pltpu.VMEM((tm, tn), jnp.float32)],
        ),
        compiler_params=pltpu.CompilerParams(
            dimension_semantics=("parallel", "parallel", "arbitrary"),
            vmem_limit_bytes=int(max(vmem_needed + (4 << 20), 32 << 20)),
        ),
        cost_estimate=pl.CostEstimate(   # advisory only
            flops=2 * m * n * k,
            transcendentals=0,
            bytes_accessed=m * k * 4 + k * n * 2 + n * 4 + m * n * 4,
        ),
    )(x, w_kn, b2d)

    if (mp, np_) != (m, n):
        out_padded = out_padded[:m, :n]
    return out_padded


def linear_lrelu(x, weight, bias):
    """Convenience wrapper: prep + apply.

    In a real model `prepare_linear_params` runs once per parameter set /
    batch bucket (the pad + transpose + bf16 cast is static) and only
    `linear_lrelu_apply` sits on the per-step hot path.
    """
    w_kn, b2d, tiles = prepare_linear_params(weight, bias, m_hint=x.shape[0])
    return linear_lrelu_apply(x, w_kn, b2d, tiles)


if __name__ == "__main__":
    key = jax.random.PRNGKey(0)

    def ref_fn(x, w, b):
        y = x @ w.T + b
        return jnp.where(y >= 0, y, 0.2 * y)

    # Case 1: nn.Linear(in_channels=32, out_channels=64), batch=8.
    k1, k2, k3, k4 = jax.random.split(key, 4)
    x = jax.random.normal(k1, (8, 32), dtype=jnp.float32)
    w = jax.random.normal(k2, (64, 32), dtype=jnp.float32) * 0.05
    b = jax.random.normal(k3, (64,), dtype=jnp.float32) * 0.05

    out = linear_lrelu(x, w, b)
    jax.block_until_ready(out)
    ref = ref_fn(x, w, b)
    assert out.shape == ref.shape
    # bf16 matmul inputs (f32 accumulation): tolerance loosened vs pure f32.
    assert jnp.allclose(out, ref, atol=5e-2, rtol=5e-2)

    # Case 2: unaligned shapes (exercises padding + a 2-block parallel grid).
    k5, k6, k7 = jax.random.split(k4, 3)
    x2 = jax.random.normal(k5, (50, 96), dtype=jnp.float32)
    w2 = jax.random.normal(k6, (130, 96), dtype=jnp.float32) * 0.05
    b2 = jax.random.normal(k7, (130,), dtype=jnp.float32) * 0.05
    out2 = linear_lrelu(x2, w2, b2)
    jax.block_until_ready(out2)
    ref2 = ref_fn(x2, w2, b2)
    assert out2.shape == ref2.shape
    assert jnp.allclose(out2, ref2, atol=5e-2, rtol=5e-2)

    print("KERNEL_OK")
</pallas_src>

<mosaic_0001>
module attributes {stable_mosaic.version = 11 : i64} {
  func.func @_linear_lrelu_kernel(%arg0: i32, %arg1: i32, %arg2: i32, %arg3: memref<8x128xf32, #tpu.memory_space<vmem>>, %arg4: memref<128x128xbf16, #tpu.memory_space<vmem>>, %arg5: memref<1x128xf32, #tpu.memory_space<vmem>>, %arg6: memref<8x128xf32, #tpu.memory_space<vmem>>, %arg7: memref<8x128xf32, #tpu.memory_space<vmem>>) attributes {dimension_semantics = [#tpu.dimension_semantics<parallel>, #tpu.dimension_semantics<parallel>, #tpu.dimension_semantics<arbitrary>], iteration_bounds = array<i64: 1, 1, 1>, scalar_prefetch = 0 : i64, scratch_operands = 1 : i64, tpu.core_type = #tpu.core_type<tc>, window_params = [{transform_indices = @transform_0, window_bounds = array<i64: 8, 128>}, {transform_indices = @transform_1, window_bounds = array<i64: 128, 128>}, {transform_indices = @transform_2, window_bounds = array<i64: 1, 128>}, {transform_indices = @transform_3, window_bounds = array<i64: 8, 128>}]} {
    %c0_i32 = arith.constant 0 : i32
    %0 = arith.cmpi eq, %arg2, %c0_i32 : i32
    %1 = arith.extui %0 : i1 to i32
    %c0_i32_0 = arith.constant 0 : i32
    %2 = arith.cmpi ne, %1, %c0_i32_0 : i32
    scf.if %2 {
      %cst_10 = arith.constant 0.000000e+00 : f32
      %13 = vector.broadcast %cst_10 : f32 to vector<8x128xf32>
      %c0_11 = arith.constant 0 : index
      %c0_12 = arith.constant 0 : index
      %14 = vector.load %arg7[%c0_11, %c0_12] : memref<8x128xf32, #tpu.memory_space<vmem>>, vector<8x128xf32>
      tpu.vector_store %arg7[%c0_11, %c0_12], %13 {strides = array<i32>} : memref<8x128xf32, #tpu.memory_space<vmem>>, vector<8x128xf32>,
    } else {
    }
    %c0 = arith.constant 0 : index
    %c0_1 = arith.constant 0 : index
    %3 = vector.load %arg7[%c0, %c0_1] : memref<8x128xf32, #tpu.memory_space<vmem>>, vector<8x128xf32>
    %c0_2 = arith.constant 0 : index
    %c0_3 = arith.constant 0 : index
    %4 = vector.load %arg3[%c0_2, %c0_3] : memref<8x128xf32, #tpu.memory_space<vmem>>, vector<8x128xf32>
    %5 = arith.truncf %4 : vector<8x128xf32> to vector<8x128xbf16>
    %c0_4 = arith.constant 0 : index
    %c0_5 = arith.constant 0 : index
    %6 = vector.load %arg4[%c0_4, %c0_5] : memref<128x128xbf16, #tpu.memory_space<vmem>>, vector<128x128xbf16>
    %cst = arith.constant dense<0.000000e+00> : vector<8x128xf32>
    %7 = tpu.matmul %5, %6, %cst {dimension_numbers = #tpu.dot_dimension_numbers<[1], [0], [0], [1], [0, 0, 1, 1], [], []>} : vector<8x128xbf16>, vector<128x128xbf16>, vector<8x128xf32> -> vector<8x128xf32>
    %8 = arith.addf %3, %7 : vector<8x128xf32>
    %c0_6 = arith.constant 0 : index
    %c0_7 = arith.constant 0 : index
    %9 = vector.load %arg7[%c0_6, %c0_7] : memref<8x128xf32, #tpu.memory_space<vmem>>, vector<8x128xf32>
    tpu.vector_store %arg7[%c0_6, %c0_7], %8 {strides = array<i32>} : memref<8x128xf32, #tpu.memory_space<vmem>>, vector<8x128xf32>,
    %c0_i32_8 = arith.constant 0 : i32
    %10 = arith.cmpi eq, %arg2, %c0_i32_8 : i32
    %11 = arith.extui %10 : i1 to i32
    %c0_i32_9 = arith.constant 0 : i32
    %12 = arith.cmpi ne, %11, %c0_i32_9 : i32
    scf.if %12 {
      %c0_10 = arith.constant 0 : index
      %c0_11 = arith.constant 0 : index
      %13 = vector.load %arg7[%c0_10, %c0_11] : memref<8x128xf32, #tpu.memory_space<vmem>>, vector<8x128xf32>
      %c0_12 = arith.constant 0 : index
      %c0_13 = arith.constant 0 : index
      %14 = vector.load %arg5[%c0_12, %c0_13] : memref<1x128xf32, #tpu.memory_space<vmem>>, vector<1x128xf32>
      %15 = vector.broadcast %14 : vector<1x128xf32> to vector<8x128xf32>
      %16 = arith.addf %13, %15 : vector<8x128xf32>
      %cst_14 = arith.constant 2.000000e-01 : f32
      %17 = vector.broadcast %cst_14 : f32 to vector<8x128xf32>
      %18 = arith.mulf %17, %16 : vector<8x128xf32>
      %19 = arith.maximumf %16, %18 : vector<8x128xf32>
      %c0_15 = arith.constant 0 : index
      %c0_16 = arith.constant 0 : index
      %20 = vector.load %arg6[%c0_15, %c0_16] : memref<8x128xf32, #tpu.memory_space<vmem>>, vector<8x128xf32>
      tpu.vector_store %arg6[%c0_15, %c0_16], %19 {strides = array<i32>} : memref<8x128xf32, #tpu.memory_space<vmem>>, vector<8x128xf32>,
    } else {
    }
    return
  }
  func.func @transform_0(%arg0: i32, %arg1: i32, %arg2: i32) -> (i32, i32) {
    %c0_i32 = arith.constant 0 : i32
    return %arg0, %arg2 : i32, i32
  }
  func.func @transform_1(%arg0: i32, %arg1: i32, %arg2: i32) -> (i32, i32) {
    %c0_i32 = arith.constant 0 : i32
    return %arg2, %arg1 : i32, i32
  }
  func.func @transform_2(%arg0: i32, %arg1: i32, %arg2: i32) -> (i32, i32) {
    %c0_i32 = arith.constant 0 : i32
    %c0_i32_0 = arith.constant 0 : i32
    return %c0_i32, %arg1 : i32, i32
  }
  func.func @transform_3(%arg0: i32, %arg1: i32, %arg2: i32) -> (i32, i32) {
    %c0_i32 = arith.constant 0 : i32
    return %arg0, %arg1 : i32, i32
  }
}

</mosaic_0001>

<llo_original>
// kernel: tpu_custom_call.1
$region0: #{tpu_custom_call.1}
  #allocation0 [shape = 'u32[]', space=smem, size = 0x4, offset = 0x4, fixed_abs, tag = 'smem constant byte address 0x4 - core index']
  #allocation1 [shape = 'u32[144,128]{1,0:T(1,128)}', space=vmem, size = 0x12000, scoped, tag = 'internal scratch']
  #allocation2 [shape = 'f32[8,128]{1,0:T(8,128)}', space=vmem, size = 0x1000, scoped, tag = 'scratch operand']
  %s0 = inlined_call_operand.hbm [shape: f32[8,128], index: 0, kind: input, shape index: {}]
  %s1 = inlined_call_operand.hbm [shape: bf16[128,128], index: 1, kind: input, shape index: {}]
  %s2 = inlined_call_operand.vmem [shape: f32[1,128], index: 2, kind: input, shape index: {}]
  %s3 = inlined_call_operand.hbm [shape: f32[8,128], index: 3, kind: output, shape index: {}]
  %s4 = sld [smem:[#allocation0]]
  $region38: #{tpu_custom_call.1} parent=0
    _
  %s6 = ssub.s32 1, %s4
  %s7 = scalar_select 0, %s6, %s4
  $region1: #{tpu_custom_call.1} parent=0
    #allocation3 [shape = 'u8[4096]{0}', space=vmem, size = 0x1000, scoped, tag = 'input window, operand 0, single buffered']
    #allocation4 [shape = 's32[1]{0}', space=sflag, size = 0x4, scoped, tag = 'scoped memory for tpu_custom_call.1']
    #allocation5 [shape = 's32[1]{0}', space=sflag, size = 0x4, scoped, tag = 'scoped memory for tpu_custom_call.1']
    #allocation6 [shape = 'u8[32768]{0}', space=vmem, size = 0x8000, scoped, tag = 'input window, operand 1, single buffered']
    #allocation7 [shape = 's32[1]{0}', space=sflag, size = 0x4, scoped, tag = 'scoped memory for tpu_custom_call.1']
    #allocation8 [shape = 'u8[4096]{0}', space=vmem, size = 0x1000, scoped, tag = 'output window, operand 0, single buffered']
    %8 = vsyncpa [#allocation4], 0
    %9 = vsyncpa [#allocation7], 0
    %10 = vsyncpa [#allocation5], 0
    // Predicated region
    $region2: #{tpu_custom_call.1} parent=1 // pred_check
      _
    $region3: #{tpu_custom_call.1} parent=1 // pred_check_branch
      %12 = sbr.rel (0) target = $region5
    $region4: #{tpu_custom_call.1} parent=1 // pred_region
      %s14 = ssub.s32 128, 128
      %15 = vsyncadd [#allocation4], %s14
      %s17 = sshll.u32 [#allocation3], 4
      %s18 = int_to_ptr.vmem [resolvable:$true] %s17
      %20 = dma.hbm_to_vmem [thread:$0]  %s0, 128, %s18, [#allocation4]
    $region5: #{tpu_custom_call.1} parent=1 // pred_fallthru
      _
    // Predicated region
    $region6: #{tpu_custom_call.1} parent=1 // pred_check
      _
    $region7: #{tpu_custom_call.1} parent=1 // pred_check_branch
      %22 = sbr.rel (0) target = $region9
    $region8: #{tpu_custom_call.1} parent=1 // pred_region
      %s24 = ssub.s32 1024, 1024
      %25 = vsyncadd [#allocation7], %s24
      %s26 = sshll.u32 [#allocation6], 4
      %s27 = int_to_ptr.vmem [resolvable:$true] %s26
      %32 = dma.hbm_to_vmem [thread:$0]  %s1, 1024, %s27, [#allocation7], 64, 64, 4
    $region9: #{tpu_custom_call.1} parent=1 // pred_fallthru
      _
    // Predicated region
    $region10: #{tpu_custom_call.1} parent=1 // pred_check
      _
    $region11: #{tpu_custom_call.1} parent=1 // pred_check_branch
      %34 = sbr.rel (0) target = $region13
    $region12: #{tpu_custom_call.1} parent=1 // pred_region
      _
    $region13: #{tpu_custom_call.1} parent=1 // pred_fallthru
      _
    // Predicated region
    $region14: #{tpu_custom_call.1} parent=1 // pred_check
      _
    $region15: #{tpu_custom_call.1} parent=1 // pred_check_branch
      %36 = sbr.rel (0) target = $region17
    $region16: #{tpu_custom_call.1} parent=1 // pred_region
      %37 = dma.done [#allocation4], 128
    $region17: #{tpu_custom_call.1} parent=1 // pred_fallthru
      _
    // Predicated region
    $region18: #{tpu_custom_call.1} parent=1 // pred_check
      _
    $region19: #{tpu_custom_call.1} parent=1 // pred_check_branch
      %39 = sbr.rel (0) target = $region21
    $region20: #{tpu_custom_call.1} parent=1 // pred_region
      %40 = dma.done [#allocation7], 1024
    $region21: #{tpu_custom_call.1} parent=1 // pred_fallthru
      _
    %p42 = scmp.eq.s32.totalorder 0, 0
    // Predicated region
    $region22: #{tpu_custom_call.1} parent=1 // pred_check
      %p43 = pneg %p42
    $region23: #{tpu_custom_call.1} parent=1 // pred_check_branch
      %45 = sbr.rel (%p43) target = $region25
    $region24: #{tpu_custom_call.1} parent=1 // pred_region
      %46 = vst [vmem:[#allocation2] sm:$0xff] 0.0
    $region25: #{tpu_custom_call.1} parent=1 // pred_fallthru
      _
    %v47 = vld [vmem:[#allocation2] sm:$0xff]
    %v48 = vld [vmem:[#allocation3] sm:$0xff]
    %v49 = vpack.c.bf16 %v48, %v48
    %v50 = vld [vmem:[#allocation6] sm:$0xf]
    %v51 = vld [vmem:[#allocation6 + $0x4] sm:$0xf]
    %v52 = vld [vmem:[#allocation6 + $0x8] sm:$0xf]
    %v53 = vld [vmem:[#allocation6 + $0xc] sm:$0xf]
    %v54 = vld [vmem:[#allocation6 + $0x10] sm:$0xf]
    %v55 = vld [vmem:[#allocation6 + $0x14] sm:$0xf]
    %v56 = vld [vmem:[#allocation6 + $0x18] sm:$0xf]
    %v57 = vld [vmem:[#allocation6 + $0x1c] sm:$0xf]
    %v58 = vld [vmem:[#allocation6 + $0x20] sm:$0xf]
    %v59 = vld [vmem:[#allocation6 + $0x24] sm:$0xf]
    %v60 = vld [vmem:[#allocation6 + $0x28] sm:$0xf]
    %v61 = vld [vmem:[#allocation6 + $0x2c] sm:$0xf]
    %v62 = vld [vmem:[#allocation6 + $0x30] sm:$0xf]
    %v63 = vld [vmem:[#allocation6 + $0x34] sm:$0xf]
    %v64 = vld [vmem:[#allocation6 + $0x38] sm:$0xf]
    %v65 = vld [vmem:[#allocation6 + $0x3c] sm:$0xf]
    %v82 = vunpack.c.l.b16 %v50
    %v83 = vunpack.c.l.b16 %v51
    %v84 = vunpack.c.l.b16 %v52
    %v85 = vunpack.c.l.b16 %v53
    %v86 = vunpack.c.l.b16 %v54
    %v87 = vunpack.c.l.b16 %v55
    %v88 = vunpack.c.l.b16 %v56
    %v89 = vunpack.c.l.b16 %v57
    %v90 = vunpack.c.l.b16 %v58
    %v91 = vunpack.c.l.b16 %v59
    %v92 = vunpack.c.l.b16 %v60
    %v93 = vunpack.c.l.b16 %v61
    %v94 = vunpack.c.l.b16 %v62
    %v95 = vunpack.c.l.b16 %v63
    %v96 = vunpack.c.l.b16 %v64
    %v97 = vunpack.c.l.b16 %v65
    %v98 = vpack.c.b16 %v83, %v82
    %v99 = vpack.c.b16 %v85, %v84
    %v100 = vpack.c.b16 %v87, %v86
    %v101 = vpack.c.b16 %v89, %v88
    %v102 = vpack.c.b16 %v91, %v90
    %v103 = vpack.c.b16 %v93, %v92
    %v104 = vpack.c.b16 %v95, %v94
    %v105 = vpack.c.b16 %v97, %v96
    %114 = vmatprep.subr.bf16.mxu0 0
    %115 = vmatpush1.bf16.msra.mxu0 %v98
    %116 = vmatprep.subr.bf16.mxu0 0
    %117 = vmatpush1.bf16.msra.mxu0 %v99
    %118 = vmatprep.subr.bf16.mxu0 0
    %119 = vmatpush1.bf16.msra.mxu0 %v100
    %120 = vmatprep.subr.bf16.mxu0 0
    %121 = vmatpush1.bf16.msra.mxu0 %v101
    %122 = vmatprep.subr.bf16.mxu0 0
    %123 = vmatpush1.bf16.msra.mxu0 %v102
    %124 = vmatprep.subr.bf16.mxu0 0
    %125 = vmatpush1.bf16.msra.mxu0 %v103
    %126 = vmatprep.subr.bf16.mxu0 0
    %127 = vmatpush1.bf16.msra.mxu0 %v104
    %128 = vmatprep.subr.bf16.mxu0 0
    %129 = vmatpush1.bf16.msra.mxu0 %v105
    %130 = vmatprep.subr.bf16.mxu0 0
    %131 = vmatpush1.bf16.msra.mxu0 0
    %132 = vmatprep.subr.bf16.mxu0 0
    %133 = vmatpush1.bf16.msra.mxu0 0
    %134 = vmatprep.subr.bf16.mxu0 0
    %135 = vmatpush1.bf16.msra.mxu0 0
    %136 = vmatprep.subr.bf16.mxu0 0
    %137 = vmatpush1.bf16.msra.mxu0 0
    %138 = vmatprep.subr.bf16.mxu0 0
    %139 = vmatpush1.bf16.msra.mxu0 0
    %140 = vmatprep.subr.bf16.mxu0 0
    %141 = vmatpush1.bf16.msra.mxu0 0
    %142 = vmatprep.subr.bf16.mxu0 0
    %143 = vmatpush1.bf16.msra.mxu0 0
    %144 = vmatprep.subr.bf16.mxu0 0
    %145 = vmatpush1.bf16.msra.mxu0 0
    %146 = vmatprep.mubr.bf16.mxu0 0
    %147 = vmatmul.mubr.bf16.gmra.mrb[0].mxu0 %v49
    %v148 = vpop.f32.mrb[0].mxu0
    %v149 = vadd.f32 0.0, %v148
    %v150 = vpop.f32.mrb[0].mxu0
    %v151 = vpop.f32.mrb[0].mxu0
    %v152 = vpop.f32.mrb[0].mxu0
    %153 = vdwg.mxu0
    %v154 = vadd.f32 %v47, %v149
    %155 = vst [vmem:[#allocation2] sm:$0xff] %v154
    // Predicated region
    $region26: #{tpu_custom_call.1} parent=1 // pred_check
      %p156 = pneg %p42
    $region27: #{tpu_custom_call.1} parent=1 // pred_check_branch
      %158 = sbr.rel (%p156) target = $region29
    $region28: #{tpu_custom_call.1} parent=1 // pred_region
      %v159 = vld [vmem:[#allocation2] sm:$0xff]
      %v160 = vld [vmem:[%s2] sm:$0x1]
      %v162 = vlaneseq
      %v163 = vshrl.u32 %v162, 7
      %v164 = vsub.s32 0, %v163
      %v165 = vrot.slane %v160, %v164
      %v167 = vadd.f32 %v159, %v165
      %v168 = vmul.f32 %v167, 0.2
      %v169 = vmax.f32 %v167, %v168
      %170 = vst [vmem:[#allocation8] sm:$0xff] %v169
    $region29: #{tpu_custom_call.1} parent=1 // pred_fallthru
      _
    // Predicated region
    $region30: #{tpu_custom_call.1} parent=1 // pred_check
      _
    $region31: #{tpu_custom_call.1} parent=1 // pred_check_branch
      %172 = sbr.rel (0) target = $region33
    $region32: #{tpu_custom_call.1} parent=1 // pred_region
      %s174 = ssub.s32 128, 128
      %175 = vsyncadd [#allocation5], %s174
      %s177 = sshll.u32 [#allocation8], 4
      %s178 = int_to_ptr.vmem [resolvable:$true] %s177
      %180 = dma.vmem_to_hbm [thread:$0]  %s178, 128, %s3, [#allocation5]
    $region33: #{tpu_custom_call.1} parent=1 // pred_fallthru
      _
    // Predicated region
    $region34: #{tpu_custom_call.1} parent=1 // pred_check
      _
    $region35: #{tpu_custom_call.1} parent=1 // pred_check_branch
      %182 = sbr.rel (0) target = $region37
    $region36: #{tpu_custom_call.1} parent=1 // pred_region
      %183 = dma.done [#allocation5], 128
    $region37: #{tpu_custom_call.1} parent=1 // pred_fallthru
      _
    %184 = vsyncpa [#allocation4], 1
    %185 = vsyncpa [#allocation7], 1
    %186 = vsyncpa [#allocation5], 1

</llo_original>
